<compile_context>
chip_gen: v7x
topology: tpu7x:2x2x1
jax: 0.10.0
libtpu: 0.0.40
codegen_flags: <defaults>
</compile_context>

<pallas_src>
import jax
import jax.numpy as jnp
from jax.experimental import pallas as pl
from jax.experimental.pallas import tpu as pltpu

_HIGH = jax.lax.Precision.HIGHEST


def _affine_kernel(x_ref, wb_ref, o_ref):
    """o = x * w_eff + b_eff — pure VPU broadcast-FMA (2 VALU ops/vreg, store-bound)."""
    w = wb_ref[0:1, :]          # (1, c5) effective weight row (static slice, free)
    b = wb_ref[1:2, :]          # (1, c5) effective bias row
    o_ref[...] = x_ref[...] * w + b


def _vmem_capacity_bytes():
    try:
        cap = getattr(pltpu.get_tpu_info(), "vmem_capacity_bytes", None)
        if cap:
            return int(cap)
    except Exception:
        pass
    return 64 << 20   # conservative fallback = v7x physical per-TC VMEM


def _round_down_8(n):
    return max(8, (n // 8) * 8)


def _round_up_8(n):
    return ((n + 7) // 8) * 8


def _pick_batch_tile(batch, c5):
    """Byte-sized batch tile:
       * ~2 MiB output blocks (elementwise-f32 data: 512+ row tiles reach ~85% of HBM roofline),
       * VMEM budget counts 2x output rows AND 2x lane-padded x rows (a (tb,1) f32 block
         occupies tb*512 B in VMEM), with headroom under the default scoped limit,
       * >=2 grid points for batch>8 so the 'parallel' axis shards across v7x's two
         TensorCores (no-op on single-TC v5e/v6e).
    """
    out_row_bytes = c5 * 4            # one f32 output row
    x_row_bytes = 128 * 4             # (tb,1) block lane-pads to 128 lanes = 512 B/row
    per_row_dbuf = 2 * (out_row_bytes + x_row_bytes)   # double-buffered

    vmem_budget = min(_vmem_capacity_bytes() // 4, 12 << 20)  # fits every default scoped limit
    tb_vmem = max(8, vmem_budget // per_row_dbuf)

    tb_target = max(8, (2 << 20) // out_row_bytes)             # ~2 MiB output block
    tb = min(tb_vmem, tb_target)

    if batch > 8:
        # Ensure at least 2 grid points so megacore can split the batch axis.
        tb = min(tb, _round_up_8(pl.cdiv(batch, 2)))
    tb = _round_down_8(min(tb, _round_up_8(batch)))
    return tb


@jax.jit
def code_generator_shared_forward(x, params):
    """x: (B, 1) float.  params: list of (W, b) with W=(in,out), b=(1,out)."""
    # ---- Pre-compose the affine chain (tiny (1,c) matmuls; full-f32 precision). ----
    w_eff, b_eff = params[0]
    for w, b in params[1:]:
        w_eff = jnp.dot(w_eff, w, precision=_HIGH)
        b_eff = jnp.dot(b_eff, w, precision=_HIGH) + b
    wb = jnp.concatenate([w_eff, b_eff], axis=0).astype(jnp.float32)   # (2, c5) slab

    x = x.astype(jnp.float32)
    B = x.shape[0]
    c5 = wb.shape[1]
    # TODO(synk): for c5 < 128 (initial_channel < 8) repack the output as a lane-dense
    # (B*c5//128, 128) slab to avoid masked vst.msk partial stores.

    tb = _pick_batch_tile(B, c5)
    n_blocks = pl.cdiv(B, tb)
    B_pad = n_blocks * tb
    if B_pad != B:
        x = jnp.pad(x, ((0, B_pad - B), (0, 0)))

    cost = pl.CostEstimate(
        flops=2 * B_pad * c5,
        transcendentals=0,
        bytes_accessed=B_pad * c5 * 4 + B_pad * 4 + 2 * c5 * 4,
    )

    out = pl.pallas_call(
        _affine_kernel,
        out_shape=jax.ShapeDtypeStruct((B_pad, c5), jnp.float32),
        grid=(n_blocks,),
        in_specs=[
            pl.BlockSpec((tb, 1), lambda i: (i, 0)),      # batch tile of x (lane-padded)
            pl.BlockSpec((2, c5), lambda i: (0, 0)),      # packed (w_eff; b_eff) slab
        ],
        out_specs=pl.BlockSpec((tb, c5), lambda i: (i, 0)),  # lane-dense when c5 % 128 == 0
        compiler_params=pltpu.CompilerParams(
            dimension_semantics=("parallel",),
            vmem_limit_bytes=32 << 20),
        cost_estimate=cost,
    )(x, wb)

    if B_pad != B:
        out = out[:B]
    return out


def init_params(key, initial_channel):
    """Deterministic synthetic init matching nn.Linear shapes (W stored transposed)."""
    c1 = initial_channel
    c3 = initial_channel * 8
    c5 = initial_channel * 16
    dims = [(1, c1), (c1, c1), (c1, c3), (c3, c3), (c3, c5), (c5, c5)]

    params = []
    for (fan_in, fan_out) in dims:
        key, kw, kb = jax.random.split(key, 3)
        bound = 1.0 / jnp.sqrt(fan_in)  # same scheme as torch.nn.Linear default
        w = jax.random.uniform(kw, (fan_in, fan_out), jnp.float32, -bound, bound)
        b = jax.random.uniform(kb, (1, fan_out), jnp.float32, -bound, bound)
        params.append((w, b))
    return params


def reference_forward(x, params):
    """Plain-JAX reference of the sequential affine chain (sanity check)."""
    h = x.astype(jnp.float32)
    for w, b in params:
        h = jnp.dot(h, w, precision=_HIGH) + b
    return h


if __name__ == "__main__":
    key = jax.random.PRNGKey(0)
    key, kx, kx2 = jax.random.split(key, 3)

    initial_channel = 8          # c1=8, c3=64, c5=128 (lane-dense output)
    batch = 16

    x = jax.random.normal(kx, (batch, 1), jnp.float32)
    params = init_params(key, initial_channel)

    out = code_generator_shared_forward(x, params)
    out = jax.block_until_ready(out)

    ref = reference_forward(x, params)
    assert out.shape == (batch, initial_channel * 16)
    # Differs from the sequential chain only by f32 rounding order.
    assert jnp.allclose(out, ref, atol=1e-3, rtol=1e-4)

    # Exercise the cdiv + padding path with an awkward batch size.
    x2 = jax.random.normal(kx2, (13, 1), jnp.float32)
    out2 = jax.block_until_ready(code_generator_shared_forward(x2, params))
    ref2 = reference_forward(x2, params)
    assert out2.shape == (13, initial_channel * 16)
    assert jnp.allclose(out2, ref2, atol=1e-3, rtol=1e-4)

    print("KERNEL_OK")
</pallas_src>

<mosaic_0001>
module attributes {stable_mosaic.version = 11 : i64} {
  func.func @_affine_kernel(%arg0: i32, %arg1: memref<8x1xf32, #tpu.memory_space<vmem>>, %arg2: memref<2x128xf32, #tpu.memory_space<vmem>>, %arg3: memref<8x128xf32, #tpu.memory_space<vmem>>) attributes {dimension_semantics = [#tpu.dimension_semantics<parallel>], iteration_bounds = array<i64: 2>, scalar_prefetch = 0 : i64, scratch_operands = 0 : i64, tpu.core_type = #tpu.core_type<tc>, window_params = [{transform_indices = @transform_0, window_bounds = array<i64: 8, 1>}, {pipeline_mode = #tpu.pipeline_mode<synchronous>, transform_indices = @transform_1, window_bounds = array<i64: 2, 128>}, {transform_indices = @transform_2, window_bounds = array<i64: 8, 128>}]} {
    %c0 = arith.constant 0 : index
    %c0_0 = arith.constant 0 : index
    %0 = vector.load %arg2[%c0, %c0_0] : memref<2x128xf32, #tpu.memory_space<vmem>>, vector<1x128xf32>
    %c1 = arith.constant 1 : index
    %c0_1 = arith.constant 0 : index
    %1 = vector.load %arg2[%c1, %c0_1] : memref<2x128xf32, #tpu.memory_space<vmem>>, vector<1x128xf32>
    %c0_2 = arith.constant 0 : index
    %c0_3 = arith.constant 0 : index
    %2 = vector.load %arg1[%c0_2, %c0_3] : memref<8x1xf32, #tpu.memory_space<vmem>>, vector<8x1xf32>
    %3 = vector.broadcast %2 : vector<8x1xf32> to vector<8x128xf32>
    %4 = vector.broadcast %0 : vector<1x128xf32> to vector<8x128xf32>
    %5 = arith.mulf %3, %4 : vector<8x128xf32>
    %6 = vector.broadcast %1 : vector<1x128xf32> to vector<8x128xf32>
    %7 = arith.addf %5, %6 : vector<8x128xf32>
    %c0_4 = arith.constant 0 : index
    %c0_5 = arith.constant 0 : index
    %8 = vector.load %arg3[%c0_4, %c0_5] : memref<8x128xf32, #tpu.memory_space<vmem>>, vector<8x128xf32>
    tpu.vector_store %arg3[%c0_4, %c0_5], %7 {strides = array<i32>} : memref<8x128xf32, #tpu.memory_space<vmem>>, vector<8x128xf32>,
    return
  }
  func.func @transform_0(%arg0: i32) -> (i32, i32) {
    %c0_i32 = arith.constant 0 : i32
    %c0_i32_0 = arith.constant 0 : i32
    return %arg0, %c0_i32 : i32, i32
  }
  func.func @transform_1(%arg0: i32) -> (i32, i32) {
    %c0_i32 = arith.constant 0 : i32
    %c0_i32_0 = arith.constant 0 : i32
    %c0_i32_1 = arith.constant 0 : i32
    return %c0_i32, %c0_i32_0 : i32, i32
  }
  func.func @transform_2(%arg0: i32) -> (i32, i32) {
    %c0_i32 = arith.constant 0 : i32
    %c0_i32_0 = arith.constant 0 : i32
    return %arg0, %c0_i32 : i32, i32
  }
}

</mosaic_0001>

<llo_original>
// kernel: code_generator_shared_forward.1
$region0: #{code_generator_shared_forward.1}
  #allocation0 [shape = 'u32[]', space=smem, size = 0x4, offset = 0x4, fixed_abs, tag = 'smem constant byte address 0x4 - core index']
  #allocation1 [shape = 'u32[144,128]{1,0:T(1,128)}', space=vmem, size = 0x12000, scoped, tag = 'internal scratch']
  %s0 = inlined_call_operand.vmem [shape: f32[16,1], index: 0, kind: input, shape index: {}]
  %s1 = inlined_call_operand.vmem [shape: f32[2,128], index: 1, kind: input, shape index: {}]
  %s2 = inlined_call_operand.hbm [shape: f32[16,128], index: 2, kind: output, shape index: {}]
  %s3 = sld [smem:[#allocation0]]
  $region41: #{code_generator_shared_forward.1} parent=0
    _
  %s5 = ssub.s32 1, %s3
  %s6 = scalar_select 0, %s5, %s3
  $region1: #{code_generator_shared_forward.1} parent=0
    #allocation2 [shape = 'u8[8192]{0}', space=vmem, size = 0x2000, scoped, tag = 'output window, operand 0']
    #allocation3 [shape = 's32[2]{0}', space=sflag, size = 0x8, scoped, tag = 'scoped memory for code_generator_shared_forward.1']
    %7 = vsyncpa [#allocation3], 0
    %s8 = scalar_lea.sflag [#allocation3], 1
    %9 = vsyncpa %s8, 0
    loop: start=0, step=1, limit=4
    $region2: #{code_generator_shared_forward.1} parent=1 // loop_pre_header
      _
    $region3: #{code_generator_shared_forward.1} parent=1 // loop_header
      %s11 = sphi 0, %s15
      %p12 = scmp.ge.s32.totalorder %s11, 4
      %s21 = sphi 0, %s23
      %s24 = sphi 0, %s21
      %s25 = sphi 0, %s24
      %s41 = sphi 0, %s25
      %s45 = sphi 0, %s45
      %s47 = sphi 0, %s45
      %s48 = sphi 0, %s47
      %s62 = sphi 0, %s48
      %s68 = sphi 0, %s70
      %s71 = sphi 0, %s68
      %s72 = sphi 0, %s71
      %s88 = sphi 0, %s72
    $region4: #{code_generator_shared_forward.1} parent=1 // loop_header_branch
      %14 = sbr.rel (%p12) target = $region8
    $region5: #{code_generator_shared_forward.1} parent=1 // loop_body
      %s16 = ssub.s32 %s11, 1
      %s17 = ssub.s32 %s11, 2
      %s18 = sadd.s32 %s11, 1
      %s19 = ssub.s32 %s11, %s18
      %p20 = scmp.eq.s32.totalorder %s19, 0
      %s22 = sadd.s32 %s21, 1
      %s23 = scalar_select %p20, %s21, %s22
      %p26 = pneg %p20
      %p27 = scmp.eq.s32.totalorder %s11, 1
      %p28 = por %p26, %p27
      %p29 = scmp.ne.s32.totalorder %s21, %s24
      %p30 = scmp.eq.s32.totalorder %s11, 0
      %p31 = por %p29, %p30
      %p32 = scmp.ne.s32.totalorder %s21, %s24
      %p33 = scmp.eq.s32.totalorder %s16, 1
      %p34 = por %p32, %p33
      %p35 = scmp.ne.s32.totalorder %s24, %s25
      %p36 = scmp.eq.s32.totalorder %s16, 0
      %p37 = por %p35, %p36
      %p38 = scmp.ne.s32.totalorder %s24, %s25
      %p39 = scmp.eq.s32.totalorder %s17, 1
      %p40 = por %p38, %p39
      %p42 = scmp.ne.s32.totalorder %s25, %s41
      %p43 = scmp.eq.s32.totalorder %s17, 0
      %p44 = por %p42, %p43
      %s46 = sadd.s32 %s45, 1
      %p49 = scmp.eq.s32.totalorder %s11, 1
      %p50 = scmp.ne.s32.totalorder %s45, %s47
      %p51 = scmp.eq.s32.totalorder %s11, 0
      %p52 = por %p50, %p51
      %p53 = scmp.ne.s32.totalorder %s45, %s47
      %p54 = scmp.eq.s32.totalorder %s16, 1
      %p55 = por %p53, %p54
      %p56 = scmp.ne.s32.totalorder %s47, %s48
      %p57 = scmp.eq.s32.totalorder %s16, 0
      %p58 = por %p56, %p57
      %p59 = scmp.ne.s32.totalorder %s47, %s48
      %p60 = scmp.eq.s32.totalorder %s17, 1
      %p61 = por %p59, %p60
      %p63 = scmp.ne.s32.totalorder %s48, %s62
      %p64 = scmp.eq.s32.totalorder %s17, 0
      %p65 = por %p63, %p64
      %s66 = ssub.s32 %s11, %s18
      %p67 = scmp.eq.s32.totalorder %s66, 0
      %s69 = sadd.s32 %s68, 1
      %s70 = scalar_select %p67, %s68, %s69
      %p73 = pneg %p67
      %p74 = scmp.eq.s32.totalorder %s11, 1
      %p75 = por %p73, %p74
      %p76 = scmp.ne.s32.totalorder %s68, %s71
      %p77 = scmp.eq.s32.totalorder %s11, 0
      %p78 = por %p76, %p77
      %p79 = scmp.ne.s32.totalorder %s68, %s71
      %p80 = scmp.eq.s32.totalorder %s16, 1
      %p81 = por %p79, %p80
      %p82 = scmp.ne.s32.totalorder %s71, %s72
      %p83 = scmp.eq.s32.totalorder %s16, 0
      %p84 = por %p82, %p83
      %p85 = scmp.ne.s32.totalorder %s71, %s72
      %p86 = scmp.eq.s32.totalorder %s17, 1
      %p87 = por %p85, %p86
      %p89 = scmp.ne.s32.totalorder %s72, %s88
      %p90 = scmp.eq.s32.totalorder %s17, 0
      %p91 = por %p89, %p90
      %p92 = scmp.le.s32.totalorder 1, %s11
      %p93 = scmp.lt.s32.totalorder %s11, 3
      %p94 = pnand %p92, %p93
      %p95 = pneg %p94
      // Predicated region
      $region9: #{code_generator_shared_forward.1} parent=5 // pred_check
        _
      $region10: #{code_generator_shared_forward.1} parent=5 // pred_check_branch
        %97 = sbr.rel (%p94) target = $region12
      $region11: #{code_generator_shared_forward.1} parent=5 // pred_region
        %s98 = ssub.s32 %s11, 1
        // Predicated region
        $region13: #{code_generator_shared_forward.1} parent=11 // pred_check
          %p99 = pneg %p58
        $region14: #{code_generator_shared_forward.1} parent=11 // pred_check_branch
          %101 = sbr.rel (%p99) target = $region16
        $region15: #{code_generator_shared_forward.1} parent=11 // pred_region
          _
        $region16: #{code_generator_shared_forward.1} parent=11 // pred_fallthru
          _
      $region12: #{code_generator_shared_forward.1} parent=5 // pred_fallthru
        _
      %p102 = scmp.lt.s32.totalorder %s11, 2
      // Predicated region
      $region17: #{code_generator_shared_forward.1} parent=5 // pred_check
        %p103 = pneg %p102
      $region18: #{code_generator_shared_forward.1} parent=5 // pred_check_branch
        %105 = sbr.rel (%p103) target = $region20
      $region19: #{code_generator_shared_forward.1} parent=5 // pred_region
        // Predicated region
        $region21: #{code_generator_shared_forward.1} parent=19 // pred_check
          %p106 = pneg %p31
        $region22: #{code_generator_shared_forward.1} parent=19 // pred_check_branch
          %108 = sbr.rel (%p106) target = $region24
        $region23: #{code_generator_shared_forward.1} parent=19 // pred_region
          %p109 = scmp.lt.s32.totalorder %s11, 1
          %s110 = scalar_select %p109, %s11, 1
          %s111 = smul.addr %s110, 8
          %s112 = scalar_lea.vmem %s0, %s111
        $region24: #{code_generator_shared_forward.1} parent=19 // pred_fallthru
          _
      $region20: #{code_generator_shared_forward.1} parent=5 // pred_fallthru
        _
      %p113 = scmp.le.s32.totalorder 1, %s11
      %p114 = scmp.lt.s32.totalorder %s11, 3
      %p115 = pnand %p113, %p114
      %p116 = pneg %p115
      // Predicated region
      $region25: #{code_generator_shared_forward.1} parent=5 // pred_check
        _
      $region26: #{code_generator_shared_forward.1} parent=5 // pred_check_branch
        %118 = sbr.rel (%p115) target = $region28
      $region27: #{code_generator_shared_forward.1} parent=5 // pred_region
        %s119 = ssub.s32 %s11, 1
        %p120 = scmp.lt.s32.totalorder %s16, 1
        %s121 = scalar_select %p120, %s16, 1
        %s122 = smul.addr %s121, 8
        %s123 = scalar_lea.vmem %s0, %s122
        %p124 = pneg %p37
        %p125 = pneg %p34
        %p126 = pneg %p58
        %p127 = pneg %p55
        %p128 = pneg %p84
        %p129 = pneg %p81
        %s130 = sand.u32 %s71, 1
        %s131 = scalar_lea.sflag [#allocation3], %s130
        %s132 = sand.u32 %s71, 1
        %s133 = smul.addr %s132, 8
        %s134 = scalar_lea.vmem [#allocation2], %s133
        %p135 = scmp.lt.s32.totalorder %s16, 1
        %s136 = scalar_select %p135, %s16, 1
        %s137 = smul.addr %s136, 8
        %s138 = scalar_lea.vmem %s0, %s137
        %v139 = vld [vmem:[%s1] sm:$0x1]
        %v140 = vld [vmem:[%s1 + $0x1] sm:$0x1]
        %v141 = vld [vmem:[%s138] sm:$0xff]
        %143 = vset.pattern.permute.xlu0 0
        %144 = vperm.xlu0 %143, %v141
        %v145 = vpop.permute.xlu0 %144
        %v147 = vlaneseq
        %v148 = vshrl.u32 %v147, 7
        %v149 = vsub.s32 0, %v148
        %v150 = vrot.slane %v139, %v149
        %v151 = vmul.f32 %v145, %v150
        %v152 = vlaneseq
        %v153 = vshrl.u32 %v152, 7
        %v154 = vsub.s32 0, %v153
        %v155 = vrot.slane %v140, %v154
        %v156 = vadd.f32 %v151, %v155
        %157 = vst [vmem:[%s134] sm:$0xff] %v156
        %s158 = sand.u32 %s71, 1
        %s159 = scalar_lea.sflag [#allocation3], %s158
        %s160 = sand.u32 %s71, 1
        %s161 = smul.addr %s160, 8
        %s162 = scalar_lea.vmem [#allocation2], %s161
        // Predicated region
        $region29: #{code_generator_shared_forward.1} parent=27 // pred_check
          %p163 = pneg %p81
        $region30: #{code_generator_shared_forward.1} parent=27 // pred_check_branch
          %165 = sbr.rel (%p163) target = $region32
        $region31: #{code_generator_shared_forward.1} parent=27 // pred_region
          %s167 = ssub.s32 128, 128
          %168 = vsyncadd %s159, %s167
          %s169 = smul.addr %s16, 128
          %s170 = scalar_lea.hbm %s2, %s169
          %s172 = sshll.u32 %s162, 4
          %s173 = int_to_ptr.vmem [resolvable:$true] %s172
          %175 = dma.vmem_to_hbm [thread:$0]  %s173, 128, %s170, %s159
        $region32: #{code_generator_shared_forward.1} parent=27 // pred_fallthru
          _
      $region28: #{code_generator_shared_forward.1} parent=5 // pred_fallthru
        _
      %p176 = scmp.le.s32.totalorder 2, %s11
      // Predicated region
      $region33: #{code_generator_shared_forward.1} parent=5 // pred_check
        %p177 = pneg %p176
      $region34: #{code_generator_shared_forward.1} parent=5 // pred_check_branch
        %179 = sbr.rel (%p177) target = $region36
      $region35: #{code_generator_shared_forward.1} parent=5 // pred_region
        %s180 = ssub.s32 %s11, 2
        // Predicated region
        $region37: #{code_generator_shared_forward.1} parent=35 // pred_check
          %p181 = pneg %p87
        $region38: #{code_generator_shared_forward.1} parent=35 // pred_check_branch
          %183 = sbr.rel (%p181) target = $region40
        $region39: #{code_generator_shared_forward.1} parent=35 // pred_region
          %s184 = sand.u32 %s72, 1
          %s185 = scalar_lea.sflag [#allocation3], %s184
          %s186 = sand.u32 %s72, 1
          %s187 = smul.addr %s186, 8
          %s188 = scalar_lea.vmem [#allocation2], %s187
          %189 = dma.done %s185, 128
        $region40: #{code_generator_shared_forward.1} parent=35 // pred_fallthru
          _
      $region36: #{code_generator_shared_forward.1} parent=5 // pred_fallthru
        _
    $region6: #{code_generator_shared_forward.1} parent=1 // loop_footer
      %s15 = sadd.s32 1, %s11
    $region7: #{code_generator_shared_forward.1} parent=1 // loop_footer_branch
      %10 = sbr.rel target = $region3
    $region8: #{code_generator_shared_forward.1} parent=1 // loop_exit
      _
    %190 = vsyncpa [#allocation3], 1
    %s191 = scalar_lea.sflag [#allocation3], 1
    %192 = vsyncpa %s191, 1

</llo_original>
